<compile_context>
chip_gen: v7x
topology: tpu7x:2x2x1
jax: 0.10.0
libtpu: 0.0.40
codegen_flags: <defaults>
</compile_context>

<pallas_src>
import jax
import jax.numpy as jnp
from jax.experimental import pallas as pl
from jax.experimental.pallas import tpu as pltpu


def _round_up(x: int, m: int) -> int:
    return ((x + m - 1) // m) * m


def _decompressor_kernel(x_ref, w1_ref, b1_ref, w2_ref, b2_ref, o_ref, h_ref):
    # Grid = (batch tiles, output-column tiles).  The hidden activation of the
    # current batch tile is computed once (first N step, j == 0) into a VMEM
    # scratch (compute dtype) and reused for every output-column tile.
    @pl.when(pl.program_id(1) == 0)
    def _():
        h = jnp.dot(x_ref[...], w1_ref[...], preferred_element_type=jnp.float32)
        h = jnp.maximum(h + b1_ref[...], 0.0)          # bias + ReLU in f32
        h_ref[...] = h.astype(h_ref.dtype)             # single cast per batch tile

    out = jnp.dot(h_ref[...], w2_ref[...], preferred_element_type=jnp.float32)
    o_ref[...] = (out + b2_ref[...]).astype(o_ref.dtype)


def decompressor_forward(x, w1, b1, w2, b2, *, tile_b=256, tile_n=512,
                         compute_dtype=None):
    """x: (B, D_in); w1: (D_in, H); b1: (H,); w2: (H, D_out); b2: (D_out,)."""
    if compute_dtype is not None:
        # bf16 MXU inputs on v6e/v7x; accumulation stays f32 inside the kernel.
        x = x.astype(compute_dtype)
        w1 = w1.astype(compute_dtype)
        w2 = w2.astype(compute_dtype)

    B, D_in = x.shape
    H = w1.shape[1]
    D_out = w2.shape[1]
    out_dtype = x.dtype
    itemsize = jnp.dtype(x.dtype).itemsize

    # ---- lane-dense padding of feature dims (multiples of 128) -------------
    d_in_p = _round_up(D_in, 128)
    h_p = _round_up(H, 128)
    d_out_p = _round_up(D_out, 128)

    # ---- batch tiling: sublane-aligned, prefer >=2 grid steps (v7x 2 TCs) --
    b8 = _round_up(B, 8)
    tile_b = _round_up(min(tile_b, b8), 8)
    if b8 // tile_b < 2 and tile_b >= 16:
        tile_b = _round_up(max(8, tile_b // 2), 8)
    b_p = _round_up(B, tile_b)
    n_b = b_p // tile_b

    # ---- output-column tiling (multiple of 128, divides padded D_out) ------
    tile_n = min(_round_up(tile_n, 128), d_out_p)
    while d_out_p % tile_n:
        tile_n -= 128
    n_n = d_out_p // tile_n

    # ---- zero-padding (exact: padded rows/cols contribute nothing) ---------
    def pad2(a, r, c):
        pr, pc = r - a.shape[0], c - a.shape[1]
        if pr or pc:
            a = jnp.pad(a, ((0, pr), (0, pc)))
        return a

    x_p = pad2(x, b_p, d_in_p)
    w1_p = pad2(w1, d_in_p, h_p)
    w2_p = pad2(w2, h_p, d_out_p)
    b1_p = pad2(b1.reshape(1, -1), 1, h_p)
    b2_p = pad2(b2.reshape(1, -1), 1, d_out_p)

    # Resident blocks (index_map constant across the grid) -> single buffer.
    resident = pl.Buffered(1)
    w2_mode = pl.Buffered(1) if n_n == 1 else None   # only resident if untiled

    # ---- explicit VMEM budget (re-derived so it also fits v7x's 64 MiB) ----
    nbuf_w2 = 1 if n_n == 1 else 2
    b_itemsize = jnp.dtype(b1_p.dtype).itemsize
    vmem_needed = (
        2 * tile_b * d_in_p * itemsize                       # x tiles (dbl buf)
        + 2 * tile_b * tile_n * itemsize                     # out tiles (dbl buf)
        + d_in_p * h_p * itemsize + h_p * b_itemsize         # w1 + b1 (single)
        + nbuf_w2 * (h_p * tile_n * itemsize + tile_n * b_itemsize)  # w2 + b2
        + tile_b * h_p * itemsize                            # hidden scratch
    )
    vmem_limit = int(min(max(2 * vmem_needed, 16 * 1024 * 1024),
                         64 * 1024 * 1024))

    flops = 2 * b_p * (d_in_p * h_p + h_p * d_out_p)
    bytes_accessed = (itemsize * (b_p * d_in_p + d_in_p * h_p + h_p * d_out_p
                                  + b_p * d_out_p)
                      + b_itemsize * (h_p + d_out_p))
    cost = pl.CostEstimate(flops=flops, transcendentals=0,
                           bytes_accessed=bytes_accessed)

    out_p = pl.pallas_call(
        _decompressor_kernel,
        out_shape=jax.ShapeDtypeStruct((b_p, d_out_p), out_dtype),
        grid_spec=pl.GridSpec(
            grid=(n_b, n_n),
            in_specs=[
                pl.BlockSpec((tile_b, d_in_p), lambda i, j: (i, 0)),
                pl.BlockSpec((d_in_p, h_p), lambda i, j: (0, 0),
                             pipeline_mode=resident),
                pl.BlockSpec((1, h_p), lambda i, j: (0, 0),
                             pipeline_mode=resident),
                pl.BlockSpec((h_p, tile_n), lambda i, j: (0, j),
                             pipeline_mode=w2_mode),
                pl.BlockSpec((1, tile_n), lambda i, j: (0, j),
                             pipeline_mode=w2_mode),
            ],
            out_specs=pl.BlockSpec((tile_b, tile_n), lambda i, j: (i, j)),
            scratch_shapes=[pltpu.VMEM((tile_b, h_p), out_dtype)],
        ),
        compiler_params=pltpu.CompilerParams(
            dimension_semantics=("parallel", "arbitrary"),
            vmem_limit_bytes=vmem_limit),
        cost_estimate=cost,
    )(x_p, w1_p, b1_p, w2_p, b2_p)

    return out_p[:B, :D_out]


def reference_forward(x, w1, b1, w2, b2):
    h = jnp.maximum(x @ w1 + b1, 0.0)
    return h @ w2 + b2


if __name__ == "__main__":
    # --- small test, consistent with the module: Linear(in,h) -> ReLU -> Linear(h,out)
    B, D_IN, HIDDEN, D_OUT = 8, 32, 64, 48

    key = jax.random.PRNGKey(0)
    kx, k1, k2, k3, k4 = jax.random.split(key, 5)

    x = jax.random.normal(kx, (B, D_IN), dtype=jnp.float32)
    w1 = jax.random.uniform(k1, (D_IN, HIDDEN), jnp.float32, -1.0, 1.0) / jnp.sqrt(D_IN)
    b1 = jax.random.uniform(k2, (HIDDEN,), jnp.float32, -1.0, 1.0) / jnp.sqrt(D_IN)
    w2 = jax.random.uniform(k3, (HIDDEN, D_OUT), jnp.float32, -1.0, 1.0) / jnp.sqrt(HIDDEN)
    b2 = jax.random.uniform(k4, (D_OUT,), jnp.float32, -1.0, 1.0) / jnp.sqrt(HIDDEN)

    out = jax.block_until_ready(decompressor_forward(x, w1, b1, w2, b2))
    ref = reference_forward(x, w1, b1, w2, b2)
    assert out.shape == (B, D_OUT)
    assert jnp.allclose(out, ref, atol=1e-5, rtol=1e-5), "mismatch vs reference (small)"

    # --- larger test: exercises multi-step batch grid, padding, hidden scratch
    B2, D_IN2, HIDDEN2, D_OUT2 = 300, 80, 512, 200
    k5, k6, k7, k8, k9 = jax.random.split(jax.random.PRNGKey(1), 5)
    x2 = jax.random.normal(k5, (B2, D_IN2), dtype=jnp.float32)
    w1b = jax.random.uniform(k6, (D_IN2, HIDDEN2), jnp.float32, -1.0, 1.0) / jnp.sqrt(D_IN2)
    b1b = jax.random.uniform(k7, (HIDDEN2,), jnp.float32, -1.0, 1.0) / jnp.sqrt(D_IN2)
    w2b = jax.random.uniform(k8, (HIDDEN2, D_OUT2), jnp.float32, -1.0, 1.0) / jnp.sqrt(HIDDEN2)
    b2b = jax.random.uniform(k9, (D_OUT2,), jnp.float32, -1.0, 1.0) / jnp.sqrt(HIDDEN2)

    out2 = jax.block_until_ready(decompressor_forward(x2, w1b, b1b, w2b, b2b))
    ref2 = reference_forward(x2, w1b, b1b, w2b, b2b)
    assert out2.shape == (B2, D_OUT2)
    assert jnp.allclose(out2, ref2, atol=1e-4, rtol=1e-4), "mismatch vs reference (large)"

    print("KERNEL_OK")
</pallas_src>

<mosaic_0001>
module attributes {stable_mosaic.version = 11 : i64} {
  func.func @_decompressor_kernel(%arg0: i32, %arg1: i32, %arg2: memref<8x128xf32, #tpu.memory_space<vmem>>, %arg3: memref<128x128xf32, #tpu.memory_space<vmem>>, %arg4: memref<1x128xf32, #tpu.memory_space<vmem>>, %arg5: memref<128x128xf32, #tpu.memory_space<vmem>>, %arg6: memref<1x128xf32, #tpu.memory_space<vmem>>, %arg7: memref<8x128xf32, #tpu.memory_space<vmem>>, %arg8: memref<8x128xf32, #tpu.memory_space<vmem>>) attributes {dimension_semantics = [#tpu.dimension_semantics<parallel>, #tpu.dimension_semantics<arbitrary>], iteration_bounds = array<i64: 1, 1>, scalar_prefetch = 0 : i64, scratch_operands = 1 : i64, tpu.core_type = #tpu.core_type<tc>, window_params = [{transform_indices = @transform_0, window_bounds = array<i64: 8, 128>}, {pipeline_mode = #tpu.pipeline_mode<synchronous>, transform_indices = @transform_1, window_bounds = array<i64: 128, 128>}, {pipeline_mode = #tpu.pipeline_mode<synchronous>, transform_indices = @transform_2, window_bounds = array<i64: 1, 128>}, {pipeline_mode = #tpu.pipeline_mode<synchronous>, transform_indices = @transform_3, window_bounds = array<i64: 128, 128>}, {pipeline_mode = #tpu.pipeline_mode<synchronous>, transform_indices = @transform_4, window_bounds = array<i64: 1, 128>}, {transform_indices = @transform_5, window_bounds = array<i64: 8, 128>}]} {
    %c0_i32 = arith.constant 0 : i32
    %0 = arith.cmpi eq, %arg1, %c0_i32 : i32
    %1 = arith.extui %0 : i1 to i32
    %c0_i32_0 = arith.constant 0 : i32
    %2 = arith.cmpi ne, %1, %c0_i32_0 : i32
    scf.if %2 {
      %c0_8 = arith.constant 0 : index
      %c0_9 = arith.constant 0 : index
      %10 = vector.load %arg2[%c0_8, %c0_9] : memref<8x128xf32, #tpu.memory_space<vmem>>, vector<8x128xf32>
      %c0_10 = arith.constant 0 : index
      %c0_11 = arith.constant 0 : index
      %11 = vector.load %arg3[%c0_10, %c0_11] : memref<128x128xf32, #tpu.memory_space<vmem>>, vector<128x128xf32>
      %cst_12 = arith.constant dense<0.000000e+00> : vector<8x128xf32>
      %12 = tpu.matmul %10, %11, %cst_12 {dimension_numbers = #tpu.dot_dimension_numbers<[1], [0], [0], [1], [0, 0, 1, 1], [], []>} : vector<8x128xf32>, vector<128x128xf32>, vector<8x128xf32> -> vector<8x128xf32>
      %c0_13 = arith.constant 0 : index
      %c0_14 = arith.constant 0 : index
      %13 = vector.load %arg4[%c0_13, %c0_14] : memref<1x128xf32, #tpu.memory_space<vmem>>, vector<1x128xf32>
      %14 = vector.broadcast %13 : vector<1x128xf32> to vector<8x128xf32>
      %15 = arith.addf %12, %14 : vector<8x128xf32>
      %cst_15 = arith.constant 0.000000e+00 : f32
      %16 = vector.broadcast %cst_15 : f32 to vector<8x128xf32>
      %17 = arith.maximumf %15, %16 : vector<8x128xf32>
      %c0_16 = arith.constant 0 : index
      %c0_17 = arith.constant 0 : index
      %18 = vector.load %arg8[%c0_16, %c0_17] : memref<8x128xf32, #tpu.memory_space<vmem>>, vector<8x128xf32>
      tpu.vector_store %arg8[%c0_16, %c0_17], %17 {strides = array<i32>} : memref<8x128xf32, #tpu.memory_space<vmem>>, vector<8x128xf32>,
    } else {
    }
    %c0 = arith.constant 0 : index
    %c0_1 = arith.constant 0 : index
    %3 = vector.load %arg8[%c0, %c0_1] : memref<8x128xf32, #tpu.memory_space<vmem>>, vector<8x128xf32>
    %c0_2 = arith.constant 0 : index
    %c0_3 = arith.constant 0 : index
    %4 = vector.load %arg5[%c0_2, %c0_3] : memref<128x128xf32, #tpu.memory_space<vmem>>, vector<128x128xf32>
    %cst = arith.constant dense<0.000000e+00> : vector<8x128xf32>
    %5 = tpu.matmul %3, %4, %cst {dimension_numbers = #tpu.dot_dimension_numbers<[1], [0], [0], [1], [0, 0, 1, 1], [], []>} : vector<8x128xf32>, vector<128x128xf32>, vector<8x128xf32> -> vector<8x128xf32>
    %c0_4 = arith.constant 0 : index
    %c0_5 = arith.constant 0 : index
    %6 = vector.load %arg6[%c0_4, %c0_5] : memref<1x128xf32, #tpu.memory_space<vmem>>, vector<1x128xf32>
    %7 = vector.broadcast %6 : vector<1x128xf32> to vector<8x128xf32>
    %8 = arith.addf %5, %7 : vector<8x128xf32>
    %c0_6 = arith.constant 0 : index
    %c0_7 = arith.constant 0 : index
    %9 = vector.load %arg7[%c0_6, %c0_7] : memref<8x128xf32, #tpu.memory_space<vmem>>, vector<8x128xf32>
    tpu.vector_store %arg7[%c0_6, %c0_7], %8 {strides = array<i32>} : memref<8x128xf32, #tpu.memory_space<vmem>>, vector<8x128xf32>,
    return
  }
  func.func @transform_0(%arg0: i32, %arg1: i32) -> (i32, i32) {
    %c0_i32 = arith.constant 0 : i32
    %c0_i32_0 = arith.constant 0 : i32
    return %arg0, %c0_i32 : i32, i32
  }
  func.func @transform_1(%arg0: i32, %arg1: i32) -> (i32, i32) {
    %c0_i32 = arith.constant 0 : i32
    %c0_i32_0 = arith.constant 0 : i32
    %c0_i32_1 = arith.constant 0 : i32
    return %c0_i32, %c0_i32_0 : i32, i32
  }
  func.func @transform_2(%arg0: i32, %arg1: i32) -> (i32, i32) {
    %c0_i32 = arith.constant 0 : i32
    %c0_i32_0 = arith.constant 0 : i32
    %c0_i32_1 = arith.constant 0 : i32
    return %c0_i32, %c0_i32_0 : i32, i32
  }
  func.func @transform_3(%arg0: i32, %arg1: i32) -> (i32, i32) {
    %c0_i32 = arith.constant 0 : i32
    %c0_i32_0 = arith.constant 0 : i32
    return %c0_i32, %arg1 : i32, i32
  }
  func.func @transform_4(%arg0: i32, %arg1: i32) -> (i32, i32) {
    %c0_i32 = arith.constant 0 : i32
    %c0_i32_0 = arith.constant 0 : i32
    return %c0_i32, %arg1 : i32, i32
  }
  func.func @transform_5(%arg0: i32, %arg1: i32) -> (i32, i32) {
    %c0_i32 = arith.constant 0 : i32
    return %arg0, %arg1 : i32, i32
  }
}

</mosaic_0001>

<llo_original>
// kernel: tpu_custom_call.1
$region0: #{tpu_custom_call.1}
  #allocation0 [shape = 'u32[]', space=smem, size = 0x4, offset = 0x4, fixed_abs, tag = 'smem constant byte address 0x4 - core index']
  #allocation1 [shape = 'u32[144,128]{1,0:T(1,128)}', space=vmem, size = 0x12000, scoped, tag = 'internal scratch']
  #allocation2 [shape = 'f32[8,128]{1,0:T(8,128)}', space=vmem, size = 0x1000, scoped, tag = 'scratch operand']
  %s0 = inlined_call_operand.hbm [shape: f32[8,128], index: 0, kind: input, shape index: {}]
  %s1 = inlined_call_operand.hbm [shape: f32[128,128], index: 1, kind: input, shape index: {}]
  %s2 = inlined_call_operand.vmem [shape: f32[1,128], index: 2, kind: input, shape index: {}]
  %s3 = inlined_call_operand.hbm [shape: f32[128,128], index: 3, kind: input, shape index: {}]
  %s4 = inlined_call_operand.vmem [shape: f32[1,128], index: 4, kind: input, shape index: {}]
  %s5 = inlined_call_operand.hbm [shape: f32[8,128], index: 5, kind: output, shape index: {}]
  %s6 = sld [smem:[#allocation0]]
  $region46: #{tpu_custom_call.1} parent=0
    _
  %s8 = ssub.s32 1, %s6
  %s9 = scalar_select 0, %s8, %s6
  $region1: #{tpu_custom_call.1} parent=0
    #allocation3 [shape = 'u8[4096]{0}', space=vmem, size = 0x1000, scoped, tag = 'input window, operand 0, single buffered']
    #allocation4 [shape = 's32[1]{0}', space=sflag, size = 0x4, scoped, tag = 'scoped memory for tpu_custom_call.1']
    #allocation5 [shape = 's32[1]{0}', space=sflag, size = 0x4, scoped, tag = 'scoped memory for tpu_custom_call.1']
    #allocation6 [shape = 'u8[65536]{0}', space=vmem, size = 0x10000, scoped, tag = 'input window, operand 1, single buffered']
    #allocation7 [shape = 's32[1]{0}', space=sflag, size = 0x4, scoped, tag = 'scoped memory for tpu_custom_call.1']
    #allocation8 [shape = 'u8[65536]{0}', space=vmem, size = 0x10000, scoped, tag = 'input window, operand 3, single buffered']
    #allocation9 [shape = 'u8[4096]{0}', space=vmem, size = 0x1000, scoped, tag = 'output window, operand 0, single buffered']
    %10 = vsyncpa [#allocation4], 0
    %11 = vsyncpa [#allocation7], 0
    %12 = vsyncpa [#allocation5], 0
    // Predicated region
    $region2: #{tpu_custom_call.1} parent=1 // pred_check
      _
    $region3: #{tpu_custom_call.1} parent=1 // pred_check_branch
      %14 = sbr.rel (0) target = $region5
    $region4: #{tpu_custom_call.1} parent=1 // pred_region
      %s16 = ssub.s32 128, 128
      %17 = vsyncadd [#allocation4], %s16
      %s19 = sshll.u32 [#allocation3], 4
      %s20 = int_to_ptr.vmem [resolvable:$true] %s19
      %22 = dma.hbm_to_vmem [thread:$0]  %s0, 128, %s20, [#allocation4]
    $region5: #{tpu_custom_call.1} parent=1 // pred_fallthru
      _
    // Predicated region
    $region6: #{tpu_custom_call.1} parent=1 // pred_check
      _
    $region7: #{tpu_custom_call.1} parent=1 // pred_check_branch
      %24 = sbr.rel (0) target = $region9
    $region8: #{tpu_custom_call.1} parent=1 // pred_region
      %s26 = ssub.s32 2048, 2048
      %27 = vsyncadd [#allocation7], %s26
      %s28 = sshll.u32 [#allocation6], 4
      %s29 = int_to_ptr.vmem [resolvable:$true] %s28
      %34 = dma.hbm_to_vmem [thread:$0]  %s1, 2048, %s29, [#allocation7], 128, 128, 8
    $region9: #{tpu_custom_call.1} parent=1 // pred_fallthru
      _
    // Predicated region
    $region10: #{tpu_custom_call.1} parent=1 // pred_check
      _
    $region11: #{tpu_custom_call.1} parent=1 // pred_check_branch
      %36 = sbr.rel (0) target = $region13
    $region12: #{tpu_custom_call.1} parent=1 // pred_region
      _
    $region13: #{tpu_custom_call.1} parent=1 // pred_fallthru
      _
    // Predicated region
    $region14: #{tpu_custom_call.1} parent=1 // pred_check
      _
    $region15: #{tpu_custom_call.1} parent=1 // pred_check_branch
      %38 = sbr.rel (0) target = $region17
    $region16: #{tpu_custom_call.1} parent=1 // pred_region
      %s40 = ssub.s32 2048, 2048
      %41 = vsyncadd [#allocation7], %s40
      %s42 = sshll.u32 [#allocation8], 4
      %s43 = int_to_ptr.vmem [resolvable:$true] %s42
      %48 = dma.hbm_to_vmem [thread:$0]  %s3, 2048, %s43, [#allocation7], 128, 128, 8
    $region17: #{tpu_custom_call.1} parent=1 // pred_fallthru
      _
    // Predicated region
    $region18: #{tpu_custom_call.1} parent=1 // pred_check
      _
    $region19: #{tpu_custom_call.1} parent=1 // pred_check_branch
      %50 = sbr.rel (0) target = $region21
    $region20: #{tpu_custom_call.1} parent=1 // pred_region
      _
    $region21: #{tpu_custom_call.1} parent=1 // pred_fallthru
      _
    // Predicated region
    $region22: #{tpu_custom_call.1} parent=1 // pred_check
      _
    $region23: #{tpu_custom_call.1} parent=1 // pred_check_branch
      %52 = sbr.rel (0) target = $region25
    $region24: #{tpu_custom_call.1} parent=1 // pred_region
      %53 = dma.done [#allocation4], 128
    $region25: #{tpu_custom_call.1} parent=1 // pred_fallthru
      _
    // Predicated region
    $region26: #{tpu_custom_call.1} parent=1 // pred_check
      _
    $region27: #{tpu_custom_call.1} parent=1 // pred_check_branch
      %55 = sbr.rel (0) target = $region29
    $region28: #{tpu_custom_call.1} parent=1 // pred_region
      %56 = dma.done [#allocation7], 2048
    $region29: #{tpu_custom_call.1} parent=1 // pred_fallthru
      _
    // Predicated region
    $region30: #{tpu_custom_call.1} parent=1 // pred_check
      _
    $region31: #{tpu_custom_call.1} parent=1 // pred_check_branch
      %58 = sbr.rel (0) target = $region33
    $region32: #{tpu_custom_call.1} parent=1 // pred_region
      %59 = dma.done [#allocation7], 2048
    $region33: #{tpu_custom_call.1} parent=1 // pred_fallthru
      _
    %p60 = scmp.eq.s32.totalorder 0, 0
    // Predicated region
    $region34: #{tpu_custom_call.1} parent=1 // pred_check
      %p61 = pneg %p60
    $region35: #{tpu_custom_call.1} parent=1 // pred_check_branch
      %63 = sbr.rel (%p61) target = $region37
    $region36: #{tpu_custom_call.1} parent=1 // pred_region
      %v64 = vld [vmem:[#allocation3] sm:$0xff]
      %v65 = vld [vmem:[#allocation6] sm:$0xff]
      %v66 = vld [vmem:[#allocation6 + $0x8] sm:$0xff]
      %v67 = vld [vmem:[#allocation6 + $0x10] sm:$0xff]
      %v68 = vld [vmem:[#allocation6 + $0x18] sm:$0xff]
      %v69 = vld [vmem:[#allocation6 + $0x20] sm:$0xff]
      %v70 = vld [vmem:[#allocation6 + $0x28] sm:$0xff]
      %v71 = vld [vmem:[#allocation6 + $0x30] sm:$0xff]
      %v72 = vld [vmem:[#allocation6 + $0x38] sm:$0xff]
      %v73 = vld [vmem:[#allocation6 + $0x40] sm:$0xff]
      %v74 = vld [vmem:[#allocation6 + $0x48] sm:$0xff]
      %v75 = vld [vmem:[#allocation6 + $0x50] sm:$0xff]
      %v76 = vld [vmem:[#allocation6 + $0x58] sm:$0xff]
      %v77 = vld [vmem:[#allocation6 + $0x60] sm:$0xff]
      %v78 = vld [vmem:[#allocation6 + $0x68] sm:$0xff]
      %v79 = vld [vmem:[#allocation6 + $0x70] sm:$0xff]
      %v80 = vld [vmem:[#allocation6 + $0x78] sm:$0xff]
      %v81 = vld [vmem:[%s2] sm:$0x1]
      %v83 = vlaneseq
      %v84 = vshrl.u32 %v83, 7
      %v85 = vsub.s32 0, %v84
      %v86 = vrot.slane %v81, %v85
      %88 = vmatprep.subr.mxu0 0.0
      %89 = vmatpush1.msra.mxu0 %v65
      %90 = vmatprep.subr.mxu0 0.0
      %91 = vmatpush1.msra.mxu0 %v66
      %92 = vmatprep.subr.mxu0 0.0
      %93 = vmatpush1.msra.mxu0 %v67
      %94 = vmatprep.subr.mxu0 0.0
      %95 = vmatpush1.msra.mxu0 %v68
      %96 = vmatprep.subr.mxu0 0.0
      %97 = vmatpush1.msra.mxu0 %v69
      %98 = vmatprep.subr.mxu0 0.0
      %99 = vmatpush1.msra.mxu0 %v70
      %100 = vmatprep.subr.mxu0 0.0
      %101 = vmatpush1.msra.mxu0 %v71
      %102 = vmatprep.subr.mxu0 0.0
      %103 = vmatpush1.msra.mxu0 %v72
      %104 = vmatprep.subr.mxu0 0.0
      %105 = vmatpush1.msra.mxu0 %v73
      %106 = vmatprep.subr.mxu0 0.0
      %107 = vmatpush1.msra.mxu0 %v74
      %108 = vmatprep.subr.mxu0 0.0
      %109 = vmatpush1.msra.mxu0 %v75
      %110 = vmatprep.subr.mxu0 0.0
      %111 = vmatpush1.msra.mxu0 %v76
      %112 = vmatprep.subr.mxu0 0.0
      %113 = vmatpush1.msra.mxu0 %v77
      %114 = vmatprep.subr.mxu0 0.0
      %115 = vmatpush1.msra.mxu0 %v78
      %116 = vmatprep.subr.mxu0 0.0
      %117 = vmatpush1.msra.mxu0 %v79
      %118 = vmatprep.subr.mxu0 0.0
      %119 = vmatpush1.msra.mxu0 %v80
      %120 = vmatprep.subr.mxu0 0.0
      %121 = vmatpush1.msra.mxu0 0.0
      %122 = vmatprep.subr.mxu0 0.0
      %123 = vmatpush1.msra.mxu0 0.0
      %124 = vmatprep.subr.mxu0 0.0
      %125 = vmatpush1.msra.mxu0 0.0
      %126 = vmatprep.subr.mxu0 0.0
      %127 = vmatpush1.msra.mxu0 0.0
      %128 = vmatprep.subr.mxu0 0.0
      %129 = vmatpush1.msra.mxu0 0.0
      %130 = vmatprep.subr.mxu0 0.0
      %131 = vmatpush1.msra.mxu0 0.0
      %132 = vmatprep.subr.mxu0 0.0
      %133 = vmatpush1.msra.mxu0 0.0
      %134 = vmatprep.subr.mxu0 0.0
      %135 = vmatpush1.msra.mxu0 0.0
      %136 = vmatprep.subr.mxu0 0.0
      %137 = vmatpush1.msra.mxu0 0.0
      %138 = vmatprep.subr.mxu0 0.0
      %139 = vmatpush1.msra.mxu0 0.0
      %140 = vmatprep.subr.mxu0 0.0
      %141 = vmatpush1.msra.mxu0 0.0
      %142 = vmatprep.subr.mxu0 0.0
      %143 = vmatpush1.msra.mxu0 0.0
      %144 = vmatprep.subr.mxu0 0.0
      %145 = vmatpush1.msra.mxu0 0.0
      %146 = vmatprep.subr.mxu0 0.0
      %147 = vmatpush1.msra.mxu0 0.0
      %148 = vmatprep.subr.mxu0 0.0
      %149 = vmatpush1.msra.mxu0 0.0
      %150 = vmatprep.subr.mxu0 0.0
      %151 = vmatpush1.msra.mxu0 0.0
      %152 = vmatprep.mubr.f32.mxu0 0.0
      %153 = vmatmul.mubr.f32.gmra.mrb[0].mxu0 %v64
      %v154 = vpop.f32.mrb[0].mxu0
      %v155 = vadd.f32 %v86, %v154
      %v156 = vpop.f32.mrb[0].mxu0
      %157 = vdwg.mxu0
      %v158 = vmax.f32 %v155, 0.0
      %159 = vst [vmem:[#allocation2] sm:$0xff] %v158
    $region37: #{tpu_custom_call.1} parent=1 // pred_fallthru
      _
    %v160 = vld [vmem:[#allocation2] sm:$0xff]
    %v161 = vld [vmem:[#allocation8] sm:$0xff]
    %v162 = vld [vmem:[#allocation8 + $0x8] sm:$0xff]
    %v163 = vld [vmem:[#allocation8 + $0x10] sm:$0xff]
    %v164 = vld [vmem:[#allocation8 + $0x18] sm:$0xff]
    %v165 = vld [vmem:[#allocation8 + $0x20] sm:$0xff]
    %v166 = vld [vmem:[#allocation8 + $0x28] sm:$0xff]
    %v167 = vld [vmem:[#allocation8 + $0x30] sm:$0xff]
    %v168 = vld [vmem:[#allocation8 + $0x38] sm:$0xff]
    %v169 = vld [vmem:[#allocation8 + $0x40] sm:$0xff]
    %v170 = vld [vmem:[#allocation8 + $0x48] sm:$0xff]
    %v171 = vld [vmem:[#allocation8 + $0x50] sm:$0xff]
    %v172 = vld [vmem:[#allocation8 + $0x58] sm:$0xff]
    %v173 = vld [vmem:[#allocation8 + $0x60] sm:$0xff]
    %v174 = vld [vmem:[#allocation8 + $0x68] sm:$0xff]
    %v175 = vld [vmem:[#allocation8 + $0x70] sm:$0xff]
    %v176 = vld [vmem:[#allocation8 + $0x78] sm:$0xff]
    %v177 = vld [vmem:[%s4] sm:$0x1]
    %v179 = vlaneseq
    %v180 = vshrl.u32 %v179, 7
    %v181 = vsub.s32 0, %v180
    %v182 = vrot.slane %v177, %v181
    %184 = vmatprep.subr.mxu0 0.0
    %185 = vmatpush1.msra.mxu0 %v161
    %186 = vmatprep.subr.mxu0 0.0
    %187 = vmatpush1.msra.mxu0 %v162
    %188 = vmatprep.subr.mxu0 0.0
    %189 = vmatpush1.msra.mxu0 %v163
    %190 = vmatprep.subr.mxu0 0.0
    %191 = vmatpush1.msra.mxu0 %v164
    %192 = vmatprep.subr.mxu0 0.0
    %193 = vmatpush1.msra.mxu0 %v165
    %194 = vmatprep.subr.mxu0 0.0
    %195 = vmatpush1.msra.mxu0 %v166
    %196 = vmatprep.subr.mxu0 0.0
    %197 = vmatpush1.msra.mxu0 %v167
    %198 = vmatprep.subr.mxu0 0.0
    %199 = vmatpush1.msra.mxu0 %v168
    %200 = vmatprep.subr.mxu0 0.0
    %201 = vmatpush1.msra.mxu0 %v169
    %202 = vmatprep.subr.mxu0 0.0
    %203 = vmatpush1.msra.mxu0 %v170
    %204 = vmatprep.subr.mxu0 0.0
    %205 = vmatpush1.msra.mxu0 %v171
    %206 = vmatprep.subr.mxu0 0.0
    %207 = vmatpush1.msra.mxu0 %v172
    %208 = vmatprep.subr.mxu0 0.0
    %209 = vmatpush1.msra.mxu0 %v173
    %210 = vmatprep.subr.mxu0 0.0
    %211 = vmatpush1.msra.mxu0 %v174
    %212 = vmatprep.subr.mxu0 0.0
    %213 = vmatpush1.msra.mxu0 %v175
    %214 = vmatprep.subr.mxu0 0.0
    %215 = vmatpush1.msra.mxu0 %v176
    %216 = vmatprep.subr.mxu0 0.0
    %217 = vmatpush1.msra.mxu0 0.0
    %218 = vmatprep.subr.mxu0 0.0
    %219 = vmatpush1.msra.mxu0 0.0
    %220 = vmatprep.subr.mxu0 0.0
    %221 = vmatpush1.msra.mxu0 0.0
    %222 = vmatprep.subr.mxu0 0.0
    %223 = vmatpush1.msra.mxu0 0.0
    %224 = vmatprep.subr.mxu0 0.0
    %225 = vmatpush1.msra.mxu0 0.0
    %226 = vmatprep.subr.mxu0 0.0
    %227 = vmatpush1.msra.mxu0 0.0
    %228 = vmatprep.subr.mxu0 0.0
    %229 = vmatpush1.msra.mxu0 0.0
    %230 = vmatprep.subr.mxu0 0.0
    %231 = vmatpush1.msra.mxu0 0.0
    %232 = vmatprep.subr.mxu0 0.0
    %233 = vmatpush1.msra.mxu0 0.0
    %234 = vmatprep.subr.mxu0 0.0
    %235 = vmatpush1.msra.mxu0 0.0
    %236 = vmatprep.subr.mxu0 0.0
    %237 = vmatpush1.msra.mxu0 0.0
    %238 = vmatprep.subr.mxu0 0.0
    %239 = vmatpush1.msra.mxu0 0.0
    %240 = vmatprep.subr.mxu0 0.0
    %241 = vmatpush1.msra.mxu0 0.0
    %242 = vmatprep.subr.mxu0 0.0
    %243 = vmatpush1.msra.mxu0 0.0
    %244 = vmatprep.subr.mxu0 0.0
    %245 = vmatpush1.msra.mxu0 0.0
    %246 = vmatprep.subr.mxu0 0.0
    %247 = vmatpush1.msra.mxu0 0.0
    %248 = vmatprep.mubr.f32.mxu0 0.0
    %249 = vmatmul.mubr.f32.gmra.mrb[0].mxu0 %v160
    %v250 = vpop.f32.mrb[0].mxu0
    %v251 = vadd.f32 %v182, %v250
    %v252 = vpop.f32.mrb[0].mxu0
    %253 = vdwg.mxu0
    %254 = vst [vmem:[#allocation9] sm:$0xff] %v251
    // Predicated region
    $region38: #{tpu_custom_call.1} parent=1 // pred_check
      _
    $region39: #{tpu_custom_call.1} parent=1 // pred_check_branch
      %256 = sbr.rel (0) target = $region41
    $region40: #{tpu_custom_call.1} parent=1 // pred_region
      %s258 = ssub.s32 128, 128
      %259 = vsyncadd [#allocation5], %s258
      %s261 = sshll.u32 [#allocation9], 4
      %s262 = int_to_ptr.vmem [resolvable:$true] %s261
      %264 = dma.vmem_to_hbm [thread:$0]  %s262, 128, %s5, [#allocation5]
    $region41: #{tpu_custom_call.1} parent=1 // pred_fallthru
      _
    // Predicated region
    $region42: #{tpu_custom_call.1} parent=1 // pred_check
      _
    $region43: #{tpu_custom_call.1} parent=1 // pred_check_branch
      %266 = sbr.rel (0) target = $region45
    $region44: #{tpu_custom_call.1} parent=1 // pred_region
      %267 = dma.done [#allocation5], 128
    $region45: #{tpu_custom_call.1} parent=1 // pred_fallthru
      _
    %268 = vsyncpa [#allocation4], 1
    %269 = vsyncpa [#allocation7], 1
    %270 = vsyncpa [#allocation5], 1

</llo_original>
